<compile_context>
chip_gen: v7x
topology: tpu7x:2x2x1
jax: 0.10.0
libtpu: 0.0.40
codegen_flags: <defaults>
</compile_context>

<pallas_src>
import jax
import jax.numpy as jnp
from jax.experimental import pallas as pl
from jax.experimental.pallas import tpu as pltpu


def mlp_kernel(x_ref, w1_ref, w2_ref, w3_ref, b_ref, o_ref):
    x = x_ref[...]
    w1 = w1_ref[...]
    w2 = w2_ref[...]
    w3 = w3_ref[...]

    h1_dim = w1.shape[1]
    h2_dim = w2.shape[1]
    n_cls = w3.shape[1]  # == 2 for this model

    # layer1 + relu
    h = jnp.dot(x, w1, preferred_element_type=jnp.float32) + b_ref[0:1, :h1_dim]
    h = jnp.maximum(h, 0.0).astype(w2.dtype)

    # layer2 + relu
    h = jnp.dot(h, w2, preferred_element_type=jnp.float32) + b_ref[1:2, :h2_dim]
    h = jnp.maximum(h, 0.0).astype(w3.dtype)

    # layer3 logits (TB, 2)
    logits = jnp.dot(h, w3, preferred_element_type=jnp.float32) + b_ref[2:3, :n_cls]

    # 2-class softmax specialized as a (numerically stable) sigmoid:
    #   p0 = exp(l0) / (exp(l0) + exp(l1)) = 1 / (1 + exp(l1 - l0)),  p1 = 1 - p0
    d = logits[:, 1:2] - logits[:, 0:1]
    p0 = 1.0 / (1.0 + jnp.exp(d))
    p1 = 1.0 - p0
    o_ref[...] = jnp.concatenate([p0, p1], axis=1).astype(o_ref.dtype)


def _round_up(n, m):
    return ((n + m - 1) // m) * m


def mlp_forward(x, params, *, block_b=512, compute_dtype=None):
    """Fused forward pass. Processes the whole batch in one pallas_call,
    tiled over the batch axis (amortizes launch/DMA overhead)."""
    w1, b1, w2, b2, w3, b3 = params
    B, D = x.shape
    assert w1.shape[0] == D
    assert w3.shape[1] == 2, "softmax specialization assumes 2 output classes"

    if compute_dtype is not None:
        x = x.astype(compute_dtype)
        w1, w2, w3 = (w.astype(compute_dtype) for w in (w1, w2, w3))

    # Pack the three tiny biases into one lane-aligned f32 array (1 DMA, not 3).
    b_all = jnp.zeros((3, 128), jnp.float32)
    b_all = b_all.at[0, : b1.size].set(b1.reshape(-1).astype(jnp.float32))
    b_all = b_all.at[1, : b2.size].set(b2.reshape(-1).astype(jnp.float32))
    b_all = b_all.at[2, : b3.size].set(b3.reshape(-1).astype(jnp.float32))

    # Batch tile: multiple of 8 (sublane), capped by block_b; pad B if ragged.
    TB = min(block_b, _round_up(B, 8))
    B_pad = _round_up(B, TB)
    if B_pad != B:
        x = jnp.pad(x, ((0, B_pad - B), (0, 0)))

    grid = (B_pad // TB,)

    out = pl.pallas_call(
        mlp_kernel,
        out_shape=jax.ShapeDtypeStruct((B_pad, 2), jnp.float32),
        grid=grid,
        in_specs=[
            pl.BlockSpec((TB, D), lambda i: (i, 0)),        # x: tiled over batch
            pl.BlockSpec(w1.shape, lambda i: (0, 0)),       # weights: VMEM-resident
            pl.BlockSpec(w2.shape, lambda i: (0, 0)),
            pl.BlockSpec(w3.shape, lambda i: (0, 0)),
            pl.BlockSpec(b_all.shape, lambda i: (0, 0)),    # packed biases
        ],
        out_specs=pl.BlockSpec((TB, 2), lambda i: (i, 0)),
        compiler_params=pltpu.CompilerParams(
            dimension_semantics=("parallel",),              # megacore on v7x
        ),
    )(x, w1, w2, w3, b_all)

    return out[:B] if B_pad != B else out


def init_params(key, input_dim):
    # Deterministic init mimicking PyTorch Linear's uniform(-1/sqrt(fan_in), +).
    dims = [(input_dim, 50), (50, 50), (50, 2)]
    params = []
    for fan_in, fan_out in dims:
        key, kw, kb = jax.random.split(key, 3)
        bound = 1.0 / float(fan_in) ** 0.5
        w = jax.random.uniform(kw, (fan_in, fan_out), jnp.float32, -bound, bound)
        b = jax.random.uniform(kb, (fan_out,), jnp.float32, -bound, bound)
        params += [w, b]
    return params


if __name__ == "__main__":
    key = jax.random.PRNGKey(0)
    input_dim = 60   # sonar dataset feature dimension
    batch = 24       # not a multiple of the batch tile -> exercises padding path

    key, kx = jax.random.split(key)
    x = jax.random.normal(kx, (batch, input_dim), jnp.float32)
    params = init_params(key, input_dim)

    # block_b=16 -> TB=16, grid=(2,): exercises batch tiling + resident weights.
    out = mlp_forward(x, params, block_b=16)
    out = jax.block_until_ready(out)

    # Pure-JAX reference of the PyTorch forward pass.
    w1, b1, w2, b2, w3, b3 = params
    h = jax.nn.relu(x @ w1 + b1)
    h = jax.nn.relu(h @ w2 + b2)
    ref = jax.nn.softmax(h @ w3 + b3, axis=1)

    assert out.shape == (batch, 2)
    row_sums = jnp.sum(out, axis=1)
    assert bool(jnp.all(jnp.abs(row_sums - 1.0) < 1e-5))
    # Tolerance accounts for MXU f32 matmul precision differences vs XLA ref.
    assert bool(jnp.allclose(out, ref, atol=2e-3, rtol=2e-3))

    print("KERNEL_OK")
</pallas_src>

<mosaic_0001>
module attributes {stable_mosaic.version = 11 : i64} {
  func.func @mlp_kernel(%arg0: i32, %arg1: memref<16x60xf32, #tpu.memory_space<vmem>>, %arg2: memref<60x50xf32, #tpu.memory_space<vmem>>, %arg3: memref<50x50xf32, #tpu.memory_space<vmem>>, %arg4: memref<50x2xf32, #tpu.memory_space<vmem>>, %arg5: memref<3x128xf32, #tpu.memory_space<vmem>>, %arg6: memref<16x2xf32, #tpu.memory_space<vmem>>) attributes {dimension_semantics = [#tpu.dimension_semantics<parallel>], iteration_bounds = array<i64: 2>, scalar_prefetch = 0 : i64, scratch_operands = 0 : i64, tpu.core_type = #tpu.core_type<tc>, window_params = [{transform_indices = @transform_0, window_bounds = array<i64: 16, 60>}, {pipeline_mode = #tpu.pipeline_mode<synchronous>, transform_indices = @transform_1, window_bounds = array<i64: 60, 50>}, {pipeline_mode = #tpu.pipeline_mode<synchronous>, transform_indices = @transform_2, window_bounds = array<i64: 50, 50>}, {pipeline_mode = #tpu.pipeline_mode<synchronous>, transform_indices = @transform_3, window_bounds = array<i64: 50, 2>}, {pipeline_mode = #tpu.pipeline_mode<synchronous>, transform_indices = @transform_4, window_bounds = array<i64: 3, 128>}, {transform_indices = @transform_5, window_bounds = array<i64: 16, 2>}]} {
    %c0 = arith.constant 0 : index
    %c0_0 = arith.constant 0 : index
    %0 = vector.load %arg1[%c0, %c0_0] : memref<16x60xf32, #tpu.memory_space<vmem>>, vector<16x60xf32>
    %c0_1 = arith.constant 0 : index
    %c0_2 = arith.constant 0 : index
    %1 = vector.load %arg2[%c0_1, %c0_2] : memref<60x50xf32, #tpu.memory_space<vmem>>, vector<60x50xf32>
    %c0_3 = arith.constant 0 : index
    %c0_4 = arith.constant 0 : index
    %2 = vector.load %arg3[%c0_3, %c0_4] : memref<50x50xf32, #tpu.memory_space<vmem>>, vector<50x50xf32>
    %c0_5 = arith.constant 0 : index
    %c0_6 = arith.constant 0 : index
    %3 = vector.load %arg4[%c0_5, %c0_6] : memref<50x2xf32, #tpu.memory_space<vmem>>, vector<50x2xf32>
    %cst = arith.constant dense<0.000000e+00> : vector<16x50xf32>
    %4 = tpu.matmul %0, %1, %cst {dimension_numbers = #tpu.dot_dimension_numbers<[1], [0], [0], [1], [0, 0, 1, 1], [], []>} : vector<16x60xf32>, vector<60x50xf32>, vector<16x50xf32> -> vector<16x50xf32>
    %c0_7 = arith.constant 0 : index
    %c0_8 = arith.constant 0 : index
    %5 = vector.load %arg5[%c0_7, %c0_8] : memref<3x128xf32, #tpu.memory_space<vmem>>, vector<1x50xf32>
    %6 = vector.broadcast %5 : vector<1x50xf32> to vector<16x50xf32>
    %7 = arith.addf %4, %6 : vector<16x50xf32>
    %cst_9 = arith.constant 0.000000e+00 : f32
    %8 = vector.broadcast %cst_9 : f32 to vector<16x50xf32>
    %9 = arith.maximumf %7, %8 : vector<16x50xf32>
    %cst_10 = arith.constant dense<0.000000e+00> : vector<16x50xf32>
    %10 = tpu.matmul %9, %2, %cst_10 {dimension_numbers = #tpu.dot_dimension_numbers<[1], [0], [0], [1], [0, 0, 1, 1], [], []>} : vector<16x50xf32>, vector<50x50xf32>, vector<16x50xf32> -> vector<16x50xf32>
    %c1 = arith.constant 1 : index
    %c0_11 = arith.constant 0 : index
    %11 = vector.load %arg5[%c1, %c0_11] : memref<3x128xf32, #tpu.memory_space<vmem>>, vector<1x50xf32>
    %12 = vector.broadcast %11 : vector<1x50xf32> to vector<16x50xf32>
    %13 = arith.addf %10, %12 : vector<16x50xf32>
    %cst_12 = arith.constant 0.000000e+00 : f32
    %14 = vector.broadcast %cst_12 : f32 to vector<16x50xf32>
    %15 = arith.maximumf %13, %14 : vector<16x50xf32>
    %cst_13 = arith.constant dense<0.000000e+00> : vector<16x2xf32>
    %16 = tpu.matmul %15, %3, %cst_13 {dimension_numbers = #tpu.dot_dimension_numbers<[1], [0], [0], [1], [0, 0, 1, 1], [], []>} : vector<16x50xf32>, vector<50x2xf32>, vector<16x2xf32> -> vector<16x2xf32>
    %c2 = arith.constant 2 : index
    %c0_14 = arith.constant 0 : index
    %17 = vector.load %arg5[%c2, %c0_14] : memref<3x128xf32, #tpu.memory_space<vmem>>, vector<1x2xf32>
    %18 = vector.broadcast %17 : vector<1x2xf32> to vector<16x2xf32>
    %19 = arith.addf %16, %18 : vector<16x2xf32>
    %20 = vector.extract_strided_slice %19 {offsets = [0, 1], sizes = [16, 1], strides = [1, 1]} : vector<16x2xf32> to vector<16x1xf32>
    %21 = vector.extract_strided_slice %19 {offsets = [0, 0], sizes = [16, 1], strides = [1, 1]} : vector<16x2xf32> to vector<16x1xf32>
    %22 = arith.subf %20, %21 : vector<16x1xf32>
    %23 = math.exp %22 : vector<16x1xf32>
    %cst_15 = arith.constant 1.000000e+00 : f32
    %24 = vector.broadcast %cst_15 : f32 to vector<16x1xf32>
    %25 = arith.addf %24, %23 : vector<16x1xf32>
    %cst_16 = arith.constant 1.000000e+00 : f32
    %26 = vector.broadcast %cst_16 : f32 to vector<16x1xf32>
    %27 = arith.divf %26, %25 : vector<16x1xf32>
    %cst_17 = arith.constant 1.000000e+00 : f32
    %28 = vector.broadcast %cst_17 : f32 to vector<16x1xf32>
    %29 = arith.subf %28, %27 : vector<16x1xf32>
    %30 = tpu.concatenate %27, %29 in 1 : vector<16x1xf32>, vector<16x1xf32> -> vector<16x2xf32>
    %c0_18 = arith.constant 0 : index
    %c0_19 = arith.constant 0 : index
    %31 = vector.load %arg6[%c0_18, %c0_19] : memref<16x2xf32, #tpu.memory_space<vmem>>, vector<16x2xf32>
    tpu.vector_store %arg6[%c0_18, %c0_19], %30 {strides = array<i32>} : memref<16x2xf32, #tpu.memory_space<vmem>>, vector<16x2xf32>,
    return
  }
  func.func @transform_0(%arg0: i32) -> (i32, i32) {
    %c0_i32 = arith.constant 0 : i32
    %c0_i32_0 = arith.constant 0 : i32
    return %arg0, %c0_i32 : i32, i32
  }
  func.func @transform_1(%arg0: i32) -> (i32, i32) {
    %c0_i32 = arith.constant 0 : i32
    %c0_i32_0 = arith.constant 0 : i32
    %c0_i32_1 = arith.constant 0 : i32
    return %c0_i32, %c0_i32_0 : i32, i32
  }
  func.func @transform_2(%arg0: i32) -> (i32, i32) {
    %c0_i32 = arith.constant 0 : i32
    %c0_i32_0 = arith.constant 0 : i32
    %c0_i32_1 = arith.constant 0 : i32
    return %c0_i32, %c0_i32_0 : i32, i32
  }
  func.func @transform_3(%arg0: i32) -> (i32, i32) {
    %c0_i32 = arith.constant 0 : i32
    %c0_i32_0 = arith.constant 0 : i32
    %c0_i32_1 = arith.constant 0 : i32
    return %c0_i32, %c0_i32_0 : i32, i32
  }
  func.func @transform_4(%arg0: i32) -> (i32, i32) {
    %c0_i32 = arith.constant 0 : i32
    %c0_i32_0 = arith.constant 0 : i32
    %c0_i32_1 = arith.constant 0 : i32
    return %c0_i32, %c0_i32_0 : i32, i32
  }
  func.func @transform_5(%arg0: i32) -> (i32, i32) {
    %c0_i32 = arith.constant 0 : i32
    %c0_i32_0 = arith.constant 0 : i32
    return %arg0, %c0_i32 : i32, i32
  }
}

</mosaic_0001>

<llo_original>
// kernel: tpu_custom_call.1
$region0: #{tpu_custom_call.1}
  #allocation0 [shape = 'u32[]', space=smem, size = 0x4, offset = 0x4, fixed_abs, tag = 'smem constant byte address 0x4 - core index']
  #allocation1 [shape = 'u32[144,128]{1,0:T(1,128)}', space=vmem, size = 0x12000, scoped, tag = 'internal scratch']
  %s0 = inlined_call_operand.vmem [shape: f32[32,60], index: 0, kind: input, shape index: {}]
  %s1 = inlined_call_operand.vmem [shape: f32[60,50], index: 1, kind: input, shape index: {}]
  %s2 = inlined_call_operand.vmem [shape: f32[50,50], index: 2, kind: input, shape index: {}]
  %s3 = inlined_call_operand.vmem [shape: f32[50,2], index: 3, kind: input, shape index: {}]
  %s4 = inlined_call_operand.vmem [shape: f32[3,128], index: 4, kind: input, shape index: {}]
  %s5 = inlined_call_operand.vmem [shape: f32[32,2], index: 5, kind: output, shape index: {}]
  %s6 = sld [smem:[#allocation0]]
  $region53: #{tpu_custom_call.1} parent=0
    _
  %s8 = ssub.s32 1, %s6
  %s9 = scalar_select 0, %s8, %s6
  loop: start=0, step=1, limit=4
  $region2: #{tpu_custom_call.1} parent=0 // loop_pre_header
    _
  $region3: #{tpu_custom_call.1} parent=0 // loop_header
    %s11 = sphi 0, %s15
    %p12 = scmp.ge.s32.totalorder %s11, 4
    %s21 = sphi 0, %s23
    %s24 = sphi 0, %s21
    %s25 = sphi 0, %s24
    %s41 = sphi 0, %s25
    %s45 = sphi 0, %s45
    %s47 = sphi 0, %s45
    %s48 = sphi 0, %s47
    %s62 = sphi 0, %s48
    %s66 = sphi 0, %s66
    %s68 = sphi 0, %s66
    %s69 = sphi 0, %s68
    %s83 = sphi 0, %s69
    %s87 = sphi 0, %s87
    %s89 = sphi 0, %s87
    %s90 = sphi 0, %s89
    %s104 = sphi 0, %s90
    %s108 = sphi 0, %s108
    %s110 = sphi 0, %s108
    %s111 = sphi 0, %s110
    %s125 = sphi 0, %s111
    %s131 = sphi 0, %s133
    %s134 = sphi 0, %s131
    %s135 = sphi 0, %s134
    %s151 = sphi 0, %s135
  $region4: #{tpu_custom_call.1} parent=0 // loop_header_branch
    %14 = sbr.rel (%p12) target = $region8
  $region5: #{tpu_custom_call.1} parent=0 // loop_body
    %s16 = ssub.s32 %s11, 1
    %s17 = ssub.s32 %s11, 2
    %s18 = sadd.s32 %s11, 1
    %s19 = ssub.s32 %s11, %s18
    %p20 = scmp.eq.s32.totalorder %s19, 0
    %s22 = sadd.s32 %s21, 1
    %s23 = scalar_select %p20, %s21, %s22
    %p26 = pneg %p20
    %p27 = scmp.eq.s32.totalorder %s11, 1
    %p28 = por %p26, %p27
    %p29 = scmp.ne.s32.totalorder %s21, %s24
    %p30 = scmp.eq.s32.totalorder %s11, 0
    %p31 = por %p29, %p30
    %p32 = scmp.ne.s32.totalorder %s21, %s24
    %p33 = scmp.eq.s32.totalorder %s16, 1
    %p34 = por %p32, %p33
    %p35 = scmp.ne.s32.totalorder %s24, %s25
    %p36 = scmp.eq.s32.totalorder %s16, 0
    %p37 = por %p35, %p36
    %p38 = scmp.ne.s32.totalorder %s24, %s25
    %p39 = scmp.eq.s32.totalorder %s17, 1
    %p40 = por %p38, %p39
    %p42 = scmp.ne.s32.totalorder %s25, %s41
    %p43 = scmp.eq.s32.totalorder %s17, 0
    %p44 = por %p42, %p43
    %s46 = sadd.s32 %s45, 1
    %p49 = scmp.eq.s32.totalorder %s11, 1
    %p50 = scmp.ne.s32.totalorder %s45, %s47
    %p51 = scmp.eq.s32.totalorder %s11, 0
    %p52 = por %p50, %p51
    %p53 = scmp.ne.s32.totalorder %s45, %s47
    %p54 = scmp.eq.s32.totalorder %s16, 1
    %p55 = por %p53, %p54
    %p56 = scmp.ne.s32.totalorder %s47, %s48
    %p57 = scmp.eq.s32.totalorder %s16, 0
    %p58 = por %p56, %p57
    %p59 = scmp.ne.s32.totalorder %s47, %s48
    %p60 = scmp.eq.s32.totalorder %s17, 1
    %p61 = por %p59, %p60
    %p63 = scmp.ne.s32.totalorder %s48, %s62
    %p64 = scmp.eq.s32.totalorder %s17, 0
    %p65 = por %p63, %p64
    %s67 = sadd.s32 %s66, 1
    %p70 = scmp.eq.s32.totalorder %s11, 1
    %p71 = scmp.ne.s32.totalorder %s66, %s68
    %p72 = scmp.eq.s32.totalorder %s11, 0
    %p73 = por %p71, %p72
    %p74 = scmp.ne.s32.totalorder %s66, %s68
    %p75 = scmp.eq.s32.totalorder %s16, 1
    %p76 = por %p74, %p75
    %p77 = scmp.ne.s32.totalorder %s68, %s69
    %p78 = scmp.eq.s32.totalorder %s16, 0
    %p79 = por %p77, %p78
    %p80 = scmp.ne.s32.totalorder %s68, %s69
    %p81 = scmp.eq.s32.totalorder %s17, 1
    %p82 = por %p80, %p81
    %p84 = scmp.ne.s32.totalorder %s69, %s83
    %p85 = scmp.eq.s32.totalorder %s17, 0
    %p86 = por %p84, %p85
    %s88 = sadd.s32 %s87, 1
    %p91 = scmp.eq.s32.totalorder %s11, 1
    %p92 = scmp.ne.s32.totalorder %s87, %s89
    %p93 = scmp.eq.s32.totalorder %s11, 0
    %p94 = por %p92, %p93
    %p95 = scmp.ne.s32.totalorder %s87, %s89
    %p96 = scmp.eq.s32.totalorder %s16, 1
    %p97 = por %p95, %p96
    %p98 = scmp.ne.s32.totalorder %s89, %s90
    %p99 = scmp.eq.s32.totalorder %s16, 0
    %p100 = por %p98, %p99
    %p101 = scmp.ne.s32.totalorder %s89, %s90
    %p102 = scmp.eq.s32.totalorder %s17, 1
    %p103 = por %p101, %p102
    %p105 = scmp.ne.s32.totalorder %s90, %s104
    %p106 = scmp.eq.s32.totalorder %s17, 0
    %p107 = por %p105, %p106
    %s109 = sadd.s32 %s108, 1
    %p112 = scmp.eq.s32.totalorder %s11, 1
    %p113 = scmp.ne.s32.totalorder %s108, %s110
    %p114 = scmp.eq.s32.totalorder %s11, 0
    %p115 = por %p113, %p114
    %p116 = scmp.ne.s32.totalorder %s108, %s110
    %p117 = scmp.eq.s32.totalorder %s16, 1
    %p118 = por %p116, %p117
    %p119 = scmp.ne.s32.totalorder %s110, %s111
    %p120 = scmp.eq.s32.totalorder %s16, 0
    %p121 = por %p119, %p120
    %p122 = scmp.ne.s32.totalorder %s110, %s111
    %p123 = scmp.eq.s32.totalorder %s17, 1
    %p124 = por %p122, %p123
    %p126 = scmp.ne.s32.totalorder %s111, %s125
    %p127 = scmp.eq.s32.totalorder %s17, 0
    %p128 = por %p126, %p127
    %s129 = ssub.s32 %s11, %s18
    %p130 = scmp.eq.s32.totalorder %s129, 0
    %s132 = sadd.s32 %s131, 1
    %s133 = scalar_select %p130, %s131, %s132
    %p136 = pneg %p130
    %p137 = scmp.eq.s32.totalorder %s11, 1
    %p138 = por %p136, %p137
    %p139 = scmp.ne.s32.totalorder %s131, %s134
    %p140 = scmp.eq.s32.totalorder %s11, 0
    %p141 = por %p139, %p140
    %p142 = scmp.ne.s32.totalorder %s131, %s134
    %p143 = scmp.eq.s32.totalorder %s16, 1
    %p144 = por %p142, %p143
    %p145 = scmp.ne.s32.totalorder %s134, %s135
    %p146 = scmp.eq.s32.totalorder %s16, 0
    %p147 = por %p145, %p146
    %p148 = scmp.ne.s32.totalorder %s134, %s135
    %p149 = scmp.eq.s32.totalorder %s17, 1
    %p150 = por %p148, %p149
    %p152 = scmp.ne.s32.totalorder %s135, %s151
    %p153 = scmp.eq.s32.totalorder %s17, 0
    %p154 = por %p152, %p153
    %p155 = scmp.le.s32.totalorder 1, %s11
    %p156 = scmp.lt.s32.totalorder %s11, 3
    %p157 = pnand %p155, %p156
    %p158 = pneg %p157
    // Predicated region
    $region9: #{tpu_custom_call.1} parent=5 // pred_check
      _
    $region10: #{tpu_custom_call.1} parent=5 // pred_check_branch
      %160 = sbr.rel (%p157) target = $region12
    $region11: #{tpu_custom_call.1} parent=5 // pred_region
      %s161 = ssub.s32 %s11, 1
      // Predicated region
      $region13: #{tpu_custom_call.1} parent=11 // pred_check
        %p162 = pneg %p58
      $region14: #{tpu_custom_call.1} parent=11 // pred_check_branch
        %164 = sbr.rel (%p162) target = $region16
      $region15: #{tpu_custom_call.1} parent=11 // pred_region
        _
      $region16: #{tpu_custom_call.1} parent=11 // pred_fallthru
        _
      // Predicated region
      $region17: #{tpu_custom_call.1} parent=11 // pred_check
        %p165 = pneg %p79
      $region18: #{tpu_custom_call.1} parent=11 // pred_check_branch
        %167 = sbr.rel (%p165) target = $region20
      $region19: #{tpu_custom_call.1} parent=11 // pred_region
        _
      $region20: #{tpu_custom_call.1} parent=11 // pred_fallthru
        _
      // Predicated region
      $region21: #{tpu_custom_call.1} parent=11 // pred_check
        %p168 = pneg %p100
      $region22: #{tpu_custom_call.1} parent=11 // pred_check_branch
        %170 = sbr.rel (%p168) target = $region24
      $region23: #{tpu_custom_call.1} parent=11 // pred_region
        _
      $region24: #{tpu_custom_call.1} parent=11 // pred_fallthru
        _
      // Predicated region
      $region25: #{tpu_custom_call.1} parent=11 // pred_check
        %p171 = pneg %p121
      $region26: #{tpu_custom_call.1} parent=11 // pred_check_branch
        %173 = sbr.rel (%p171) target = $region28
      $region27: #{tpu_custom_call.1} parent=11 // pred_region
        _
      $region28: #{tpu_custom_call.1} parent=11 // pred_fallthru
        _
    $region12: #{tpu_custom_call.1} parent=5 // pred_fallthru
      _
    %p174 = scmp.lt.s32.totalorder %s11, 2
    // Predicated region
    $region29: #{tpu_custom_call.1} parent=5 // pred_check
      %p175 = pneg %p174
    $region30: #{tpu_custom_call.1} parent=5 // pred_check_branch
      %177 = sbr.rel (%p175) target = $region32
    $region31: #{tpu_custom_call.1} parent=5 // pred_region
      // Predicated region
      $region33: #{tpu_custom_call.1} parent=31 // pred_check
        %p178 = pneg %p31
      $region34: #{tpu_custom_call.1} parent=31 // pred_check_branch
        %180 = sbr.rel (%p178) target = $region36
      $region35: #{tpu_custom_call.1} parent=31 // pred_region
        %s181 = smul.u32 2, %s11
        %p182 = scmp.lt.s32.totalorder %s181, 3
        %s183 = scalar_select %p182, %s181, 3
        %s184 = smul.addr %s183, 8
        %s185 = scalar_lea.vmem %s0, %s184
        %s186 = smul.u32 2, %s11
      $region36: #{tpu_custom_call.1} parent=31 // pred_fallthru
        _
    $region32: #{tpu_custom_call.1} parent=5 // pred_fallthru
      _
    %p187 = scmp.le.s32.totalorder 1, %s11
    %p188 = scmp.lt.s32.totalorder %s11, 3
    %p189 = pnand %p187, %p188
    %p190 = pneg %p189
    // Predicated region
    $region37: #{tpu_custom_call.1} parent=5 // pred_check
      _
    $region38: #{tpu_custom_call.1} parent=5 // pred_check_branch
      %192 = sbr.rel (%p189) target = $region40
    $region39: #{tpu_custom_call.1} parent=5 // pred_region
      %s193 = ssub.s32 %s11, 1
      %s194 = smul.u32 2, %s16
      %p195 = scmp.lt.s32.totalorder %s194, 3
      %s196 = scalar_select %p195, %s194, 3
      %s197 = smul.addr %s196, 8
      %s198 = scalar_lea.vmem %s0, %s197
      %p199 = pneg %p37
      %p200 = pneg %p34
      %p201 = pneg %p58
      %p202 = pneg %p55
      %p203 = pneg %p79
      %p204 = pneg %p76
      %p205 = pneg %p100
      %p206 = pneg %p97
      %p207 = pneg %p121
      %p208 = pneg %p118
      %p209 = pneg %p147
      %p210 = pneg %p144
      %s211 = smul.u32 2, %s16
      %p212 = scmp.lt.s32.totalorder %s211, 3
      %s213 = scalar_select %p212, %s211, 3
      %s214 = smul.addr %s213, 8
      %s215 = scalar_lea.vmem %s5, %s214
      %s216 = smul.u32 2, %s16
      %p217 = scmp.lt.s32.totalorder %s216, 3
      %s218 = scalar_select %p217, %s216, 3
      %s219 = smul.addr %s218, 8
      %s220 = scalar_lea.vmem %s0, %s219
      %s221 = smul.u32 2, %s16
      %s222 = smul.u32 2, %s16
      %p223 = scmp.lt.s32.totalorder %s222, 3
      %s224 = scalar_select %p223, %s222, 3
      %s225 = smul.addr %s224, 8
      %s226 = scalar_lea.vmem %s5, %s225
      %s227 = smul.u32 2, %s16
      %v228 = vld [vmem:[%s220] sm:$0xff]
      %v229 = vld [vmem:[%s220 + $0x8] sm:$0xff]
      %v230 = vld [vmem:[%s1] sm:$0xff]
      %v231 = vld [vmem:[%s1 + $0x8] sm:$0xff]
      %v232 = vld [vmem:[%s1 + $0x10] sm:$0xff]
      %v233 = vld [vmem:[%s1 + $0x18] sm:$0xff]
      %v234 = vld [vmem:[%s1 + $0x20] sm:$0xff]
      %v235 = vld [vmem:[%s1 + $0x28] sm:$0xff]
      %v236 = vld [vmem:[%s1 + $0x30] sm:$0xff]
      %v237 = vld [vmem:[%s1 + $0x38] sm:$0xf]
      %v238 = vld [vmem:[%s2] sm:$0xff]
      %v239 = vld [vmem:[%s2 + $0x8] sm:$0xff]
      %v240 = vld [vmem:[%s2 + $0x10] sm:$0xff]
      %v241 = vld [vmem:[%s2 + $0x18] sm:$0xff]
      %v242 = vld [vmem:[%s2 + $0x20] sm:$0xff]
      %v243 = vld [vmem:[%s2 + $0x28] sm:$0xff]
      %v244 = vld [vmem:[%s2 + $0x30] sm:$0x3]
      %v245 = vld [vmem:[%s3] sm:$0xff]
      %v246 = vld [vmem:[%s3 + $0x8] sm:$0xff]
      %v247 = vld [vmem:[%s3 + $0x10] sm:$0xff]
      %v248 = vld [vmem:[%s3 + $0x18] sm:$0xff]
      %v249 = vld [vmem:[%s3 + $0x20] sm:$0xff]
      %v250 = vld [vmem:[%s3 + $0x28] sm:$0xff]
      %v251 = vld [vmem:[%s3 + $0x30] sm:$0x3]
      %v252 = vld [vmem:[%s4] sm:$0x1]
      %v253 = vlaneseq
      %v254 = vshrl.u32 %v253, 7
      %v255 = vsub.s32 0, %v254
      %v256 = vrot.slane %v252, %v255
      %vm257 = vcmask 490496
      %v259 = vsel %vm257, %v228, 0
      %v262 = vsel %vm257, %v229, 0
      %vm264 = vcmask 1043456
      %v266 = vsel %vm264, %v237, 0
      %268 = vmatprep.subr.mxu0 0.0
      %269 = vmatpush1.msra.mxu0 %v230
      %270 = vmatprep.subr.mxu0 0.0
      %271 = vmatpush1.msra.mxu0 %v231
      %272 = vmatprep.subr.mxu0 0.0
      %273 = vmatpush1.msra.mxu0 %v232
      %274 = vmatprep.subr.mxu0 0.0
      %275 = vmatpush1.msra.mxu0 %v233
      %276 = vmatprep.subr.mxu0 0.0
      %277 = vmatpush1.msra.mxu0 %v234
      %278 = vmatprep.subr.mxu0 0.0
      %279 = vmatpush1.msra.mxu0 %v235
      %280 = vmatprep.subr.mxu0 0.0
      %281 = vmatpush1.msra.mxu0 %v236
      %282 = vmatprep.subr.mxu0 0.0
      %283 = vmatpush1.msra.mxu0 %v266
      %284 = vmatprep.subr.mxu0 0.0
      %285 = vmatpush1.msra.mxu0 0.0
      %286 = vmatprep.subr.mxu0 0.0
      %287 = vmatpush1.msra.mxu0 0.0
      %288 = vmatprep.subr.mxu0 0.0
      %289 = vmatpush1.msra.mxu0 0.0
      %290 = vmatprep.subr.mxu0 0.0
      %291 = vmatpush1.msra.mxu0 0.0
      %292 = vmatprep.subr.mxu0 0.0
      %293 = vmatpush1.msra.mxu0 0.0
      %294 = vmatprep.subr.mxu0 0.0
      %295 = vmatpush1.msra.mxu0 0.0
      %296 = vmatprep.subr.mxu0 0.0
      %297 = vmatpush1.msra.mxu0 0.0
      %298 = vmatprep.subr.mxu0 0.0
      %299 = vmatpush1.msra.mxu0 0.0
      %300 = vmatprep.subr.mxu0 0.0
      %301 = vmatpush1.msra.mxu0 0.0
      %302 = vmatprep.subr.mxu0 0.0
      %303 = vmatpush1.msra.mxu0 0.0
      %304 = vmatprep.subr.mxu0 0.0
      %305 = vmatpush1.msra.mxu0 0.0
      %306 = vmatprep.subr.mxu0 0.0
      %307 = vmatpush1.msra.mxu0 0.0
      %308 = vmatprep.subr.mxu0 0.0
      %309 = vmatpush1.msra.mxu0 0.0
      %310 = vmatprep.subr.mxu0 0.0
      %311 = vmatpush1.msra.mxu0 0.0
      %312 = vmatprep.subr.mxu0 0.0
      %313 = vmatpush1.msra.mxu0 0.0
      %314 = vmatprep.subr.mxu0 0.0
      %315 = vmatpush1.msra.mxu0 0.0
      %316 = vmatprep.subr.mxu0 0.0
      %317 = vmatpush1.msra.mxu0 0.0
      %318 = vmatprep.subr.mxu0 0.0
      %319 = vmatpush1.msra.mxu0 0.0
      %320 = vmatprep.subr.mxu0 0.0
      %321 = vmatpush1.msra.mxu0 0.0
      %322 = vmatprep.subr.mxu0 0.0
      %323 = vmatpush1.msra.mxu0 0.0
      %324 = vmatprep.subr.mxu0 0.0
      %325 = vmatpush1.msra.mxu0 0.0
      %326 = vmatprep.subr.mxu0 0.0
      %327 = vmatpush1.msra.mxu0 0.0
      %328 = vmatprep.subr.mxu0 0.0
      %329 = vmatpush1.msra.mxu0 0.0
      %330 = vmatprep.subr.mxu0 0.0
      %331 = vmatpush1.msra.mxu0 0.0
      %332 = vmatprep.mubr.f32.mxu0 0.0
      %333 = vmatmul.mubr.f32.gmra.mrb[0].mxu0 %v259
      %v334 = vpop.f32.mrb[0].mxu0
      %v335 = vadd.f32 %v256, %v334
      %v336 = vpop.f32.mrb[0].mxu0
      %337 = vmatprep.mubr.f32.mxu0 0.0
      %338 = vmatmul.mubr.f32.gmra.mrb[0].mxu0 %v262
      %v339 = vpop.f32.mrb[0].mxu0
      %v340 = vadd.f32 %v256, %v339
      %v341 = vpop.f32.mrb[0].mxu0
      %342 = vdwg.mxu0
      %v343 = vmax.f32 %v335, 0.0
      %v344 = vmax.f32 %v340, 0.0
      %v345 = vld [vmem:[%s4 + $0x1] sm:$0x1]
      %v346 = vlaneseq
      %v347 = vshrl.u32 %v346, 7
      %v348 = vsub.s32 0, %v347
      %v349 = vrot.slane %v345, %v348
      %vm350 = vcmask 408576
      %v352 = vsel %vm350, %v343, 0
      %v355 = vsel %vm350, %v344, 0
      %vm357 = vcmask 1041408
      %v359 = vsel %vm357, %v244, 0
      %361 = vmatprep.subr.mxu0 0.0
      %362 = vmatpush1.msra.mxu0 %v238
      %363 = vmatprep.subr.mxu0 0.0
      %364 = vmatpush1.msra.mxu0 %v239
      %365 = vmatprep.subr.mxu0 0.0
      %366 = vmatpush1.msra.mxu0 %v240
      %367 = vmatprep.subr.mxu0 0.0
      %368 = vmatpush1.msra.mxu0 %v241
      %369 = vmatprep.subr.mxu0 0.0
      %370 = vmatpush1.msra.mxu0 %v242
      %371 = vmatprep.subr.mxu0 0.0
      %372 = vmatpush1.msra.mxu0 %v243
      %373 = vmatprep.subr.mxu0 0.0
      %374 = vmatpush1.msra.mxu0 %v359
      %375 = vmatprep.subr.mxu0 0.0
      %376 = vmatpush1.msra.mxu0 0.0
      %377 = vmatprep.subr.mxu0 0.0
      %378 = vmatpush1.msra.mxu0 0.0
      %379 = vmatprep.subr.mxu0 0.0
      %380 = vmatpush1.msra.mxu0 0.0
      %381 = vmatprep.subr.mxu0 0.0
      %382 = vmatpush1.msra.mxu0 0.0
      %383 = vmatprep.subr.mxu0 0.0
      %384 = vmatpush1.msra.mxu0 0.0
      %385 = vmatprep.subr.mxu0 0.0
      %386 = vmatpush1.msra.mxu0 0.0
      %387 = vmatprep.subr.mxu0 0.0
      %388 = vmatpush1.msra.mxu0 0.0
      %389 = vmatprep.subr.mxu0 0.0
      %390 = vmatpush1.msra.mxu0 0.0
      %391 = vmatprep.subr.mxu0 0.0
      %392 = vmatpush1.msra.mxu0 0.0
      %393 = vmatprep.subr.mxu0 0.0
      %394 = vmatpush1.msra.mxu0 0.0
      %395 = vmatprep.subr.mxu0 0.0
      %396 = vmatpush1.msra.mxu0 0.0
      %397 = vmatprep.subr.mxu0 0.0
      %398 = vmatpush1.msra.mxu0 0.0
      %399 = vmatprep.subr.mxu0 0.0
      %400 = vmatpush1.msra.mxu0 0.0
      %401 = vmatprep.subr.mxu0 0.0
      %402 = vmatpush1.msra.mxu0 0.0
      %403 = vmatprep.subr.mxu0 0.0
      %404 = vmatpush1.msra.mxu0 0.0
      %405 = vmatprep.subr.mxu0 0.0
      %406 = vmatpush1.msra.mxu0 0.0
      %407 = vmatprep.subr.mxu0 0.0
      %408 = vmatpush1.msra.mxu0 0.0
      %409 = vmatprep.subr.mxu0 0.0
      %410 = vmatpush1.msra.mxu0 0.0
      %411 = vmatprep.subr.mxu0 0.0
      %412 = vmatpush1.msra.mxu0 0.0
      %413 = vmatprep.subr.mxu0 0.0
      %414 = vmatpush1.msra.mxu0 0.0
      %415 = vmatprep.subr.mxu0 0.0
      %416 = vmatpush1.msra.mxu0 0.0
      %417 = vmatprep.subr.mxu0 0.0
      %418 = vmatpush1.msra.mxu0 0.0
      %419 = vmatprep.subr.mxu0 0.0
      %420 = vmatpush1.msra.mxu0 0.0
      %421 = vmatprep.subr.mxu0 0.0
      %422 = vmatpush1.msra.mxu0 0.0
      %423 = vmatprep.subr.mxu0 0.0
      %424 = vmatpush1.msra.mxu0 0.0
      %425 = vmatprep.mubr.f32.mxu0 0.0
      %426 = vmatmul.mubr.f32.gmra.mrb[0].mxu0 %v352
      %v427 = vpop.f32.mrb[0].mxu0
      %v428 = vadd.f32 %v349, %v427
      %v429 = vpop.f32.mrb[0].mxu0
      %430 = vmatprep.mubr.f32.mxu0 0.0
      %431 = vmatmul.mubr.f32.gmra.mrb[0].mxu0 %v355
      %v432 = vpop.f32.mrb[0].mxu0
      %v433 = vadd.f32 %v349, %v432
      %v434 = vpop.f32.mrb[0].mxu0
      %435 = vdwg.mxu0
      %v436 = vmax.f32 %v428, 0.0
      %v437 = vmax.f32 %v433, 0.0
      %v438 = vld [vmem:[%s4 + $0x2] sm:$0x1]
      %v439 = vlaneseq
      %v440 = vshrl.u32 %v439, 7
      %v441 = vsub.s32 0, %v440
      %v442 = vrot.slane %v438, %v441
      %v444 = vsel %vm350, %v436, 0
      %v447 = vsel %vm350, %v437, 0
      %v450 = vsel %vm357, %v251, 0
      %452 = vmatprep.subr.mxu0 0.0
      %453 = vmatpush1.msra.mxu0 %v245
      %454 = vmatprep.subr.mxu0 0.0
      %455 = vmatpush1.msra.mxu0 %v246
      %456 = vmatprep.subr.mxu0 0.0
      %457 = vmatpush1.msra.mxu0 %v247
      %458 = vmatprep.subr.mxu0 0.0
      %459 = vmatpush1.msra.mxu0 %v248
      %460 = vmatprep.subr.mxu0 0.0
      %461 = vmatpush1.msra.mxu0 %v249
      %462 = vmatprep.subr.mxu0 0.0
      %463 = vmatpush1.msra.mxu0 %v250
      %464 = vmatprep.subr.mxu0 0.0
      %465 = vmatpush1.msra.mxu0 %v450
      %466 = vmatprep.subr.mxu0 0.0
      %467 = vmatpush1.msra.mxu0 0.0
      %468 = vmatprep.subr.mxu0 0.0
      %469 = vmatpush1.msra.mxu0 0.0
      %470 = vmatprep.subr.mxu0 0.0
      %471 = vmatpush1.msra.mxu0 0.0
      %472 = vmatprep.subr.mxu0 0.0
      %473 = vmatpush1.msra.mxu0 0.0
      %474 = vmatprep.subr.mxu0 0.0
      %475 = vmatpush1.msra.mxu0 0.0
      %476 = vmatprep.subr.mxu0 0.0
      %477 = vmatpush1.msra.mxu0 0.0
      %478 = vmatprep.subr.mxu0 0.0
      %479 = vmatpush1.msra.mxu0 0.0
      %480 = vmatprep.subr.mxu0 0.0
      %481 = vmatpush1.msra.mxu0 0.0
      %482 = vmatprep.subr.mxu0 0.0
      %483 = vmatpush1.msra.mxu0 0.0
      %484 = vmatprep.subr.mxu0 0.0
      %485 = vmatpush1.msra.mxu0 0.0
      %486 = vmatprep.subr.mxu0 0.0
      %487 = vmatpush1.msra.mxu0 0.0
      %488 = vmatprep.subr.mxu0 0.0
      %489 = vmatpush1.msra.mxu0 0.0
      %490 = vmatprep.subr.mxu0 0.0
      %491 = vmatpush1.msra.mxu0 0.0
      %492 = vmatprep.subr.mxu0 0.0
      %493 = vmatpush1.msra.mxu0 0.0
      %494 = vmatprep.subr.mxu0 0.0
      %495 = vmatpush1.msra.mxu0 0.0
      %496 = vmatprep.subr.mxu0 0.0
      %497 = vmatpush1.msra.mxu0 0.0
      %498 = vmatprep.subr.mxu0 0.0
      %499 = vmatpush1.msra.mxu0 0.0
      %500 = vmatprep.subr.mxu0 0.0
      %501 = vmatpush1.msra.mxu0 0.0
      %502 = vmatprep.subr.mxu0 0.0
      %503 = vmatpush1.msra.mxu0 0.0
      %504 = vmatprep.subr.mxu0 0.0
      %505 = vmatpush1.msra.mxu0 0.0
      %506 = vmatprep.subr.mxu0 0.0
      %507 = vmatpush1.msra.mxu0 0.0
      %508 = vmatprep.subr.mxu0 0.0
      %509 = vmatpush1.msra.mxu0 0.0
      %510 = vmatprep.subr.mxu0 0.0
      %511 = vmatpush1.msra.mxu0 0.0
      %512 = vmatprep.subr.mxu0 0.0
      %513 = vmatpush1.msra.mxu0 0.0
      %514 = vmatprep.subr.mxu0 0.0
      %515 = vmatpush1.msra.mxu0 0.0
      %516 = vmatprep.mubr.f32.mxu0 0.0
      %517 = vmatmul.mubr.f32.gmra.mrb[0].mxu0 %v444
      %v518 = vpop.f32.mrb[0].mxu0
      %v519 = vadd.f32 %v442, %v518
      %v520 = vpop.f32.mrb[0].mxu0
      %521 = vmatprep.mubr.f32.mxu0 0.0
      %522 = vmatmul.mubr.f32.gmra.mrb[0].mxu0 %v447
      %v523 = vpop.f32.mrb[0].mxu0
      %v524 = vadd.f32 %v442, %v523
      %v525 = vpop.f32.mrb[0].mxu0
      %526 = vdwg.mxu0
      %529 = vrot.lane.b32.xlu0 %v519, 1
      %v530 = vpop.permute.xlu0 %529
      %531 = vrot.lane.b32.xlu0 %v524, 1
      %v532 = vpop.permute.xlu0 %531
      %v535 = vsub.f32 %v519, %v530
      %v536 = vsub.f32 %v524, %v532
      %v537 = vmul.f32 %v535, 1.442695
      %v538 = vpow.pop %v537
      %v539 = vmul.f32 %v536, 1.442695
      %v540 = vpow.pop %v539
      %v541 = vadd.f32 %v538, 1.0
      %v542 = vadd.f32 %v540, 1.0
      %v543 = vrcp.pop %v541
      %v544 = vmul.f32 1.0, %v543
      %v545 = vrcp.pop %v542
      %v546 = vmul.f32 1.0, %v545
      %v547 = vsub.f32 1.0, %v544
      %v548 = vsub.f32 1.0, %v546
      %551 = vrot.lane.b32.xlu0 %v544, 127
      %v552 = vpop.permute.xlu0 %551
      %553 = vrot.lane.b32.xlu0 %v546, 127
      %v554 = vpop.permute.xlu0 %553
      %vm557 = vcmask 7168
      %v558 = vsel %vm557, %v552, %v547
      %v559 = vsel %vm557, %v554, %v548
      %vm560 = vcmask 15360
      %561 = vst.msk [vmem:[%s226] sm:$0xff] %vm560, %v558
      %562 = vst.msk [vmem:[%s226 + $0x8] sm:$0xff] %vm560, %v559
      %s563 = smul.u32 2, %s16
      %p564 = scmp.lt.s32.totalorder %s563, 3
      %s565 = scalar_select %p564, %s563, 3
      %s566 = smul.addr %s565, 8
      %s567 = scalar_lea.vmem %s5, %s566
      // Predicated region
      $region41: #{tpu_custom_call.1} parent=39 // pred_check
        %p568 = pneg %p144
      $region42: #{tpu_custom_call.1} parent=39 // pred_check_branch
        %570 = sbr.rel (%p568) target = $region44
      $region43: #{tpu_custom_call.1} parent=39 // pred_region
        %s571 = smul.u32 2, %s16
      $region44: #{tpu_custom_call.1} parent=39 // pred_fallthru
        _
    $region40: #{tpu_custom_call.1} parent=5 // pred_fallthru
      _
    %p572 = scmp.le.s32.totalorder 2, %s11
    // Predicated region
    $region45: #{tpu_custom_call.1} parent=5 // pred_check
      %p573 = pneg %p572
    $region46: #{tpu_custom_call.1} parent=5 // pred_check_branch
      %575 = sbr.rel (%p573) target = $region48
    $region47: #{tpu_custom_call.1} parent=5 // pred_region
      %s576 = ssub.s32 %s11, 2
      // Predicated region
      $region49: #{tpu_custom_call.1} parent=47 // pred_check
        %p577 = pneg %p150
      $region50: #{tpu_custom_call.1} parent=47 // pred_check_branch
        %579 = sbr.rel (%p577) target = $region52
      $region51: #{tpu_custom_call.1} parent=47 // pred_region
        %s580 = smul.u32 2, %s17
        %p581 = scmp.lt.s32.totalorder %s580, 3
        %s582 = scalar_select %p581, %s580, 3
        %s583 = smul.addr %s582, 8
        %s584 = scalar_lea.vmem %s5, %s583
      $region52: #{tpu_custom_call.1} parent=47 // pred_fallthru
        _
    $region48: #{tpu_custom_call.1} parent=5 // pred_fallthru
      _
  $region6: #{tpu_custom_call.1} parent=0 // loop_footer
    %s15 = sadd.s32 1, %s11
  $region7: #{tpu_custom_call.1} parent=0 // loop_footer_branch
    %10 = sbr.rel target = $region3
  $region8: #{tpu_custom_call.1} parent=0 // loop_exit
    _

</llo_original>
